<compile_context>
chip_gen: v6e
topology: v6e:2x2x1
jax: 0.10.0
libtpu: 0.0.40
codegen_flags: <defaults>
</compile_context>

<pallas_src>
import functools
import math

import jax
import jax.numpy as jnp
from jax import lax
from jax.experimental import pallas as pl
from jax.experimental.pallas import tpu as pltpu

_IN = 20          # state features
_HID = 64         # per-head hidden width
_HID2 = 2 * _HID  # fused hidden width (actor lanes | critic lanes) = 128


def _round_up(x, m):
    return ((x + m - 1) // m) * m


def _actor_critic_kernel(x_ref, w1_ref, b1_ref, w2_ref, b2_ref, out_ref, *,
                         num_actions):
    x = x_ref[...]                                               # (TB, 20)

    # Fused first layer: actor hidden in lanes [:64], critic hidden in [64:128].
    h = jnp.dot(x, w1_ref[...], preferred_element_type=jnp.float32)
    h = jnp.maximum(h + b1_ref[...], 0.0)                        # (TB, 128)

    # Fused second layer -> narrow output slab:
    #   lanes [:A] = actor logits, lane A = critic value, remaining lanes = 0.
    z = jnp.dot(h, w2_ref[...], preferred_element_type=jnp.float32)
    z = z + b2_ref[...]                                          # (TB, out_w)

    # Numerically-stable softmax over the actor lanes only.
    lanes = lax.broadcasted_iota(jnp.int32, z.shape, 1)
    actor_mask = lanes < num_actions
    masked = jnp.where(actor_mask, z, jnp.float32(-1e30))
    m = jnp.max(masked, axis=-1, keepdims=True)
    e = jnp.where(actor_mask, jnp.exp(masked - m), 0.0)
    denom = jnp.sum(e, axis=-1, keepdims=True)
    probs = e * pl.reciprocal(denom, approx=False)  # exact: keeps sum==1 @ 1e-5

    # probs in actor lanes; critic value (and zero padding) in the remaining lanes.
    out_ref[...] = jnp.where(actor_mask, probs, z)


def fuse_params(params):
    """Precompute fused/lane-packed weights once (hoisted out of the forward path)."""
    A = params["w2a"].shape[1]
    out_w = _round_up(A + 1, 8)      # narrow output: actor lanes | critic lane | pad

    # --- fuse first-layer weights/biases: (20, 128) / (1, 128) ---
    w1 = jnp.concatenate([params["w1a"], params["w1c"]], axis=1)
    b1 = jnp.concatenate([params["b1a"].reshape(1, _HID),
                          params["b1c"].reshape(1, _HID)], axis=1)

    # --- fuse second layer into one (128, out_w) matrix + bias ---
    w2 = jnp.zeros((_HID2, out_w), jnp.float32)
    w2 = w2.at[:_HID, :A].set(params["w2a"])
    w2 = w2.at[_HID:, A:A + 1].set(params["w2c"])
    b2 = jnp.zeros((1, out_w), jnp.float32)
    b2 = b2.at[:, :A].set(params["b2a"].reshape(1, A))
    b2 = b2.at[:, A:A + 1].set(params["b2c"].reshape(1, 1))

    return {"w1": w1, "b1": b1, "w2": w2, "b2": b2,
            "num_actions": A, "out_w": out_w}


def actor_critic_forward(state, fused, *, block_b=1024):
    """state: (B, 20) f32. fused: output of fuse_params(). Returns (probs, value)."""
    B = state.shape[0]
    A = fused["num_actions"]
    out_w = fused["out_w"]

    # --- batch tiling (multiple of 8); aim for >= 2 grid steps so both v7x
    #     TensorCores are used and the double-buffered DMA pipeline overlaps. ---
    b8 = _round_up(B, 8)
    if b8 <= 256:
        tb = b8
    else:
        tb = min(block_b, _round_up((b8 + 1) // 2, 8))
    b_pad = _round_up(b8, tb)
    x = state if b_pad == B else jnp.pad(state, ((0, b_pad - B), (0, 0)))
    grid = (b_pad // tb,)

    flops = 2 * b_pad * (_IN * _HID2 + _HID2 * out_w)
    bytes_accessed = 4 * (b_pad * (_IN + out_w)
                          + _IN * _HID2 + _HID2 + _HID2 * out_w + out_w)
    cost = pl.CostEstimate(flops=flops,
                           transcendentals=b_pad * A,
                           bytes_accessed=bytes_accessed)

    kernel = functools.partial(_actor_critic_kernel, num_actions=A)

    out = pl.pallas_call(
        kernel,
        out_shape=jax.ShapeDtypeStruct((b_pad, out_w), jnp.float32),
        grid=grid,
        in_specs=[
            pl.BlockSpec((tb, _IN), lambda i: (i, 0)),        # state tile (pipelined)
            pl.BlockSpec((_IN, _HID2), lambda i: (0, 0)),     # w1 (VMEM-resident)
            pl.BlockSpec((1, _HID2), lambda i: (0, 0)),       # b1
            pl.BlockSpec((_HID2, out_w), lambda i: (0, 0)),   # w2
            pl.BlockSpec((1, out_w), lambda i: (0, 0)),       # b2
        ],
        out_specs=pl.BlockSpec((tb, out_w), lambda i: (i, 0)),
        compiler_params=pltpu.CompilerParams(
            dimension_semantics=("parallel",),
            vmem_limit_bytes=32 * 1024 * 1024,
        ),
        cost_estimate=cost,
    )(x, fused["w1"], fused["b1"], fused["w2"], fused["b2"])

    probs = out[:B, :A]
    value = out[:B, A:A + 1]
    return probs, value


def _xavier_uniform(key, fan_in, fan_out):
    # matches torch.nn.init.xavier_uniform_ (gain=1)
    limit = math.sqrt(6.0 / (fan_in + fan_out))
    return jax.random.uniform(key, (fan_in, fan_out), jnp.float32, -limit, limit)


def init_params(key, num_actions):
    k1, k2, k3, k4 = jax.random.split(key, 4)
    return {
        # actor
        "w1a": _xavier_uniform(k1, _IN, _HID),
        "b1a": jnp.zeros((_HID,), jnp.float32),
        "w2a": _xavier_uniform(k2, _HID, num_actions),
        "b2a": jnp.zeros((num_actions,), jnp.float32),
        # critic
        "w1c": _xavier_uniform(k3, _IN, _HID),
        "b1c": jnp.zeros((_HID,), jnp.float32),
        "w2c": _xavier_uniform(k4, _HID, 1),
        "b2c": jnp.zeros((1,), jnp.float32),
    }


if __name__ == "__main__":
    key = jax.random.PRNGKey(0)
    k_params, k_state = jax.random.split(key)

    num_actions = 6
    batch = 8
    params = init_params(k_params, num_actions)
    fused = fuse_params(params)                 # weight fusion hoisted: done once
    state = jax.random.normal(k_state, (batch, _IN), jnp.float32)

    probs, value = actor_critic_forward(state, fused)
    jax.block_until_ready((probs, value))

    # sanity: reference in plain JAX (matches the PyTorch module semantics)
    h_a = jnp.maximum(state @ params["w1a"] + params["b1a"], 0.0)
    logits = h_a @ params["w2a"] + params["b2a"]
    ref_probs = jax.nn.softmax(logits, axis=-1)
    h_c = jnp.maximum(state @ params["w1c"] + params["b1c"], 0.0)
    ref_value = h_c @ params["w2c"] + params["b2c"].reshape(1, 1)

    assert probs.shape == (batch, num_actions) and value.shape == (batch, 1)
    assert jnp.allclose(probs, ref_probs, atol=1e-5), "actor probs mismatch"
    assert jnp.allclose(value, ref_value, atol=1e-5), "critic value mismatch"
    assert jnp.allclose(jnp.sum(probs, axis=-1), 1.0, atol=1e-5)

    # also exercise a multi-tile batch (grid >= 2, padded batch path)
    big_state = jax.random.normal(jax.random.PRNGKey(1), (1000, _IN), jnp.float32)
    big_probs, big_value = actor_critic_forward(big_state, fused)
    jax.block_until_ready((big_probs, big_value))
    ref_big = jax.nn.softmax(
        jnp.maximum(big_state @ params["w1a"] + params["b1a"], 0.0)
        @ params["w2a"] + params["b2a"], axis=-1)
    assert big_probs.shape == (1000, num_actions) and big_value.shape == (1000, 1)
    assert jnp.allclose(big_probs, ref_big, atol=1e-5), "big-batch probs mismatch"

    print("KERNEL_OK")
</pallas_src>

<mosaic_0001>
module attributes {stable_mosaic.version = 11 : i64} {
  func.func @_actor_critic_kernel(%arg0: i32, %arg1: memref<8x20xf32, #tpu.memory_space<vmem>>, %arg2: memref<20x128xf32, #tpu.memory_space<vmem>>, %arg3: memref<1x128xf32, #tpu.memory_space<vmem>>, %arg4: memref<128x8xf32, #tpu.memory_space<vmem>>, %arg5: memref<1x8xf32, #tpu.memory_space<vmem>>, %arg6: memref<8x8xf32, #tpu.memory_space<vmem>>) attributes {dimension_semantics = [#tpu.dimension_semantics<parallel>], iteration_bounds = array<i64: 1>, scalar_prefetch = 0 : i64, scratch_operands = 0 : i64, tpu.core_type = #tpu.core_type<tc>, window_params = [{transform_indices = @transform_0, window_bounds = array<i64: 8, 20>}, {pipeline_mode = #tpu.pipeline_mode<synchronous>, transform_indices = @transform_1, window_bounds = array<i64: 20, 128>}, {pipeline_mode = #tpu.pipeline_mode<synchronous>, transform_indices = @transform_2, window_bounds = array<i64: 1, 128>}, {pipeline_mode = #tpu.pipeline_mode<synchronous>, transform_indices = @transform_3, window_bounds = array<i64: 128, 8>}, {pipeline_mode = #tpu.pipeline_mode<synchronous>, transform_indices = @transform_4, window_bounds = array<i64: 1, 8>}, {transform_indices = @transform_5, window_bounds = array<i64: 8, 8>}]} {
    %c0 = arith.constant 0 : index
    %c0_0 = arith.constant 0 : index
    %0 = vector.load %arg1[%c0, %c0_0] : memref<8x20xf32, #tpu.memory_space<vmem>>, vector<8x20xf32>
    %c0_1 = arith.constant 0 : index
    %c0_2 = arith.constant 0 : index
    %1 = vector.load %arg2[%c0_1, %c0_2] : memref<20x128xf32, #tpu.memory_space<vmem>>, vector<20x128xf32>
    %cst = arith.constant dense<0.000000e+00> : vector<8x128xf32>
    %2 = tpu.matmul %0, %1, %cst {dimension_numbers = #tpu.dot_dimension_numbers<[1], [0], [0], [1], [0, 0, 1, 1], [], []>} : vector<8x20xf32>, vector<20x128xf32>, vector<8x128xf32> -> vector<8x128xf32>
    %c0_3 = arith.constant 0 : index
    %c0_4 = arith.constant 0 : index
    %3 = vector.load %arg3[%c0_3, %c0_4] : memref<1x128xf32, #tpu.memory_space<vmem>>, vector<1x128xf32>
    %4 = vector.broadcast %3 : vector<1x128xf32> to vector<8x128xf32>
    %5 = arith.addf %2, %4 : vector<8x128xf32>
    %cst_5 = arith.constant 0.000000e+00 : f32
    %6 = vector.broadcast %cst_5 : f32 to vector<8x128xf32>
    %7 = arith.maximumf %5, %6 : vector<8x128xf32>
    %c0_6 = arith.constant 0 : index
    %c0_7 = arith.constant 0 : index
    %8 = vector.load %arg4[%c0_6, %c0_7] : memref<128x8xf32, #tpu.memory_space<vmem>>, vector<128x8xf32>
    %cst_8 = arith.constant dense<0.000000e+00> : vector<8x8xf32>
    %9 = tpu.matmul %7, %8, %cst_8 {dimension_numbers = #tpu.dot_dimension_numbers<[1], [0], [0], [1], [0, 0, 1, 1], [], []>} : vector<8x128xf32>, vector<128x8xf32>, vector<8x8xf32> -> vector<8x8xf32>
    %c0_9 = arith.constant 0 : index
    %c0_10 = arith.constant 0 : index
    %10 = vector.load %arg5[%c0_9, %c0_10] : memref<1x8xf32, #tpu.memory_space<vmem>>, vector<1x8xf32>
    %11 = vector.broadcast %10 : vector<1x8xf32> to vector<8x8xf32>
    %12 = arith.addf %9, %11 : vector<8x8xf32>
    %13 = tpu.iota {dimensions = array<i32: 1>} : vector<8x8xi32>
    %c6_i32 = arith.constant 6 : i32
    %14 = vector.broadcast %c6_i32 : i32 to vector<8x8xi32>
    %15 = arith.cmpi slt, %13, %14 : vector<8x8xi32>
    %cst_11 = arith.constant -1.000000e+30 : f32
    %16 = vector.broadcast %cst_11 : f32 to vector<8x8xf32>
    %17 = arith.select %15, %12, %16 : vector<8x8xi1>, vector<8x8xf32>
    %cst_12 = arith.constant dense<0xFF800000> : vector<8xf32>
    %18 = vector.multi_reduction <maximumf>, %17, %cst_12 [1] : vector<8x8xf32> to vector<8xf32>
    %19 = vector.shape_cast %18 : vector<8xf32> to vector<8x1xf32>
    %20 = vector.broadcast %19 : vector<8x1xf32> to vector<8x8xf32>
    %21 = arith.subf %17, %20 : vector<8x8xf32>
    %22 = math.exp %21 : vector<8x8xf32>
    %cst_13 = arith.constant 0.000000e+00 : f32
    %23 = vector.broadcast %cst_13 : f32 to vector<8x8xf32>
    %24 = arith.select %15, %22, %23 : vector<8x8xi1>, vector<8x8xf32>
    %cst_14 = arith.constant dense<0.000000e+00> : vector<8xf32>
    %25 = vector.multi_reduction <add>, %24, %cst_14 [1] : vector<8x8xf32> to vector<8xf32>
    %26 = vector.shape_cast %25 : vector<8xf32> to vector<8x1xf32>
    %27 = tpu.reciprocal %26 : vector<8x1xf32> -> vector<8x1xf32>
    %28 = vector.broadcast %27 : vector<8x1xf32> to vector<8x8xf32>
    %29 = arith.mulf %24, %28 : vector<8x8xf32>
    %30 = arith.select %15, %29, %12 : vector<8x8xi1>, vector<8x8xf32>
    %c0_15 = arith.constant 0 : index
    %c0_16 = arith.constant 0 : index
    %31 = vector.load %arg6[%c0_15, %c0_16] : memref<8x8xf32, #tpu.memory_space<vmem>>, vector<8x8xf32>
    tpu.vector_store %arg6[%c0_15, %c0_16], %30 {strides = array<i32>} : memref<8x8xf32, #tpu.memory_space<vmem>>, vector<8x8xf32>,
    return
  }
  func.func @transform_0(%arg0: i32) -> (i32, i32) {
    %c0_i32 = arith.constant 0 : i32
    %c0_i32_0 = arith.constant 0 : i32
    return %arg0, %c0_i32 : i32, i32
  }
  func.func @transform_1(%arg0: i32) -> (i32, i32) {
    %c0_i32 = arith.constant 0 : i32
    %c0_i32_0 = arith.constant 0 : i32
    %c0_i32_1 = arith.constant 0 : i32
    return %c0_i32, %c0_i32_0 : i32, i32
  }
  func.func @transform_2(%arg0: i32) -> (i32, i32) {
    %c0_i32 = arith.constant 0 : i32
    %c0_i32_0 = arith.constant 0 : i32
    %c0_i32_1 = arith.constant 0 : i32
    return %c0_i32, %c0_i32_0 : i32, i32
  }
  func.func @transform_3(%arg0: i32) -> (i32, i32) {
    %c0_i32 = arith.constant 0 : i32
    %c0_i32_0 = arith.constant 0 : i32
    %c0_i32_1 = arith.constant 0 : i32
    return %c0_i32, %c0_i32_0 : i32, i32
  }
  func.func @transform_4(%arg0: i32) -> (i32, i32) {
    %c0_i32 = arith.constant 0 : i32
    %c0_i32_0 = arith.constant 0 : i32
    %c0_i32_1 = arith.constant 0 : i32
    return %c0_i32, %c0_i32_0 : i32, i32
  }
  func.func @transform_5(%arg0: i32) -> (i32, i32) {
    %c0_i32 = arith.constant 0 : i32
    %c0_i32_0 = arith.constant 0 : i32
    return %arg0, %c0_i32 : i32, i32
  }
}

</mosaic_0001>

<llo_original>
// kernel: tpu_custom_call.1
$region0: #{tpu_custom_call.1}
  #allocation0 [shape = 'u32[]', space=smem, size = 0x4, offset = 0x4, fixed_abs, tag = 'smem constant byte address 0x4 - core index']
  #allocation1 [shape = 'u32[144,128]{1,0:T(1,128)}', space=vmem, size = 0x12000, scoped, tag = 'internal scratch']
  %s0 = inlined_call_operand.vmem [shape: f32[8,20], index: 0, kind: input, shape index: {}]
  %s1 = inlined_call_operand.vmem [shape: f32[20,128], index: 1, kind: input, shape index: {}]
  %s2 = inlined_call_operand.vmem [shape: f32[1,128], index: 2, kind: input, shape index: {}]
  %s3 = inlined_call_operand.vmem [shape: f32[128,8], index: 3, kind: input, shape index: {}]
  %s4 = inlined_call_operand.vmem [shape: f32[1,8], index: 4, kind: input, shape index: {}]
  %s5 = inlined_call_operand.hbm [shape: f32[8,8], index: 5, kind: output, shape index: {}]
  %s6 = sld [smem:[#allocation0]]
  $region30: #{tpu_custom_call.1} parent=0
    _
  %s8 = ssub.s32 1, %s6
  %s9 = scalar_select 0, %s8, %s6
  $region1: #{tpu_custom_call.1} parent=0
    #allocation2 [shape = 'u8[4096]{0}', space=vmem, size = 0x1000, scoped, tag = 'output window, operand 0, single buffered']
    #allocation3 [shape = 's32[1]{0}', space=sflag, size = 0x4, scoped, tag = 'scoped memory for tpu_custom_call.1']
    %10 = vsyncpa [#allocation3], 0
    // Predicated region
    $region2: #{tpu_custom_call.1} parent=1 // pred_check
      _
    $region3: #{tpu_custom_call.1} parent=1 // pred_check_branch
      %12 = sbr.rel (0) target = $region5
    $region4: #{tpu_custom_call.1} parent=1 // pred_region
      _
    $region5: #{tpu_custom_call.1} parent=1 // pred_fallthru
      _
    // Predicated region
    $region6: #{tpu_custom_call.1} parent=1 // pred_check
      _
    $region7: #{tpu_custom_call.1} parent=1 // pred_check_branch
      %14 = sbr.rel (0) target = $region9
    $region8: #{tpu_custom_call.1} parent=1 // pred_region
      _
    $region9: #{tpu_custom_call.1} parent=1 // pred_fallthru
      _
    // Predicated region
    $region10: #{tpu_custom_call.1} parent=1 // pred_check
      _
    $region11: #{tpu_custom_call.1} parent=1 // pred_check_branch
      %16 = sbr.rel (0) target = $region13
    $region12: #{tpu_custom_call.1} parent=1 // pred_region
      _
    $region13: #{tpu_custom_call.1} parent=1 // pred_fallthru
      _
    // Predicated region
    $region14: #{tpu_custom_call.1} parent=1 // pred_check
      _
    $region15: #{tpu_custom_call.1} parent=1 // pred_check_branch
      %18 = sbr.rel (0) target = $region17
    $region16: #{tpu_custom_call.1} parent=1 // pred_region
      _
    $region17: #{tpu_custom_call.1} parent=1 // pred_fallthru
      _
    // Predicated region
    $region18: #{tpu_custom_call.1} parent=1 // pred_check
      _
    $region19: #{tpu_custom_call.1} parent=1 // pred_check_branch
      %20 = sbr.rel (0) target = $region21
    $region20: #{tpu_custom_call.1} parent=1 // pred_region
      _
    $region21: #{tpu_custom_call.1} parent=1 // pred_fallthru
      _
    %v21 = vld [vmem:[%s0] sm:$0xff]
    %v22 = vld [vmem:[%s1] sm:$0xff]
    %v23 = vld [vmem:[%s1 + $0x8] sm:$0xff]
    %v24 = vld [vmem:[%s1 + $0x10] sm:$0xf]
    %v25 = vld [vmem:[%s2] sm:$0x1]
    %v27 = vlaneseq
    %v28 = vshrl.u32 %v27, 7
    %v29 = vsub.s32 0, %v28
    %v30 = vrot.slane %v25, %v29
    %vm32 = vcmask 162816
    %v34 = vsel %vm32, %v21, 0
    %vm36 = vcmask 1043456
    %v38 = vsel %vm36, %v24, 0
    %40 = vmatprep.subr.mxu0 0.0
    %41 = vmatpush1.msra.mxu0 0.0
    %42 = vmatprep.subr.mxu0 0.0
    %43 = vmatpush1.msra.mxu0 0.0
    %44 = vmatprep.subr.mxu0 0.0
    %45 = vmatpush1.msra.mxu0 0.0
    %46 = vmatprep.subr.mxu0 0.0
    %47 = vmatpush1.msra.mxu0 0.0
    %48 = vmatprep.subr.mxu0 0.0
    %49 = vmatpush1.msra.mxu0 0.0
    %50 = vmatprep.subr.mxu0 0.0
    %51 = vmatpush1.msra.mxu0 0.0
    %52 = vmatprep.subr.mxu0 0.0
    %53 = vmatpush1.msra.mxu0 0.0
    %54 = vmatprep.subr.mxu0 0.0
    %55 = vmatpush1.msra.mxu0 0.0
    %56 = vmatprep.subr.mxu0 0.0
    %57 = vmatpush1.msra.mxu0 0.0
    %58 = vmatprep.subr.mxu0 0.0
    %59 = vmatpush1.msra.mxu0 0.0
    %60 = vmatprep.subr.mxu0 0.0
    %61 = vmatpush1.msra.mxu0 0.0
    %62 = vmatprep.subr.mxu0 0.0
    %63 = vmatpush1.msra.mxu0 0.0
    %64 = vmatprep.subr.mxu0 0.0
    %65 = vmatpush1.msra.mxu0 0.0
    %66 = vmatprep.subr.mxu0 0.0
    %67 = vmatpush1.msra.mxu0 %v38
    %68 = vmatprep.subr.mxu0 0.0
    %69 = vmatpush1.msra.mxu0 %v23
    %70 = vmatprep.subr.mxu0 0.0
    %71 = vmatpush1.msra.mxu0 %v22
    %72 = vmatprep.subr.mxu0 0.0
    %73 = vmatpush2.msra.mxu0 0.0
    %74 = vmatprep.subr.mxu0 0.0
    %75 = vmatpush2.msra.mxu0 0.0
    %76 = vmatprep.subr.mxu0 0.0
    %77 = vmatpush2.msra.mxu0 0.0
    %78 = vmatprep.subr.mxu0 0.0
    %79 = vmatpush2.msra.mxu0 0.0
    %80 = vmatprep.subr.mxu0 0.0
    %81 = vmatpush2.msra.mxu0 0.0
    %82 = vmatprep.subr.mxu0 0.0
    %83 = vmatpush2.msra.mxu0 0.0
    %84 = vmatprep.subr.mxu0 0.0
    %85 = vmatpush2.msra.mxu0 0.0
    %86 = vmatprep.subr.mxu0 0.0
    %87 = vmatpush2.msra.mxu0 0.0
    %88 = vmatprep.subr.mxu0 0.0
    %89 = vmatpush2.msra.mxu0 0.0
    %90 = vmatprep.subr.mxu0 0.0
    %91 = vmatpush2.msra.mxu0 0.0
    %92 = vmatprep.subr.mxu0 0.0
    %93 = vmatpush2.msra.mxu0 0.0
    %94 = vmatprep.subr.mxu0 0.0
    %95 = vmatpush2.msra.mxu0 0.0
    %96 = vmatprep.subr.mxu0 0.0
    %97 = vmatpush2.msra.mxu0 0.0
    %98 = vmatprep.subr.mxu0 0.0
    %99 = vmatpush2.msra.mxu0 0.0
    %100 = vmatprep.subr.mxu0 0.0
    %101 = vmatpush2.msra.mxu0 0.0
    %102 = vmatprep.subr.mxu0 0.0
    %103 = vmatpush2.msra.mxu0 0.0
    %104 = vmatprep.mubr.f32.mxu0 0.0
    %105 = vmatmul.mubr.f32.gmra.mxu0 %v34
    %v106 = vpop.f32.mrf.mxu0
    %v107 = vadd.f32 %v30, %v106
    %v108 = vpop.f32.mrf.mxu0
    %109 = vdwg.mxu0
    %v110 = vmax.f32 %v107, 0.0
    %v111 = vld [vmem:[%s3] sm:$0xff]
    %v112 = vld [vmem:[%s3 + $0x8] sm:$0xff]
    %v113 = vld [vmem:[%s3 + $0x10] sm:$0xff]
    %v114 = vld [vmem:[%s3 + $0x18] sm:$0xff]
    %v115 = vld [vmem:[%s3 + $0x20] sm:$0xff]
    %v116 = vld [vmem:[%s3 + $0x28] sm:$0xff]
    %v117 = vld [vmem:[%s3 + $0x30] sm:$0xff]
    %v118 = vld [vmem:[%s3 + $0x38] sm:$0xff]
    %v119 = vld [vmem:[%s3 + $0x40] sm:$0xff]
    %v120 = vld [vmem:[%s3 + $0x48] sm:$0xff]
    %v121 = vld [vmem:[%s3 + $0x50] sm:$0xff]
    %v122 = vld [vmem:[%s3 + $0x58] sm:$0xff]
    %v123 = vld [vmem:[%s3 + $0x60] sm:$0xff]
    %v124 = vld [vmem:[%s3 + $0x68] sm:$0xff]
    %v125 = vld [vmem:[%s3 + $0x70] sm:$0xff]
    %v126 = vld [vmem:[%s3 + $0x78] sm:$0xff]
    %v127 = vld [vmem:[%s4] sm:$0x1]
    %v129 = vlaneseq
    %v130 = vshrl.u32 %v129, 7
    %v131 = vsub.s32 0, %v130
    %v132 = vrot.slane %v127, %v131
    %134 = vmatprep.subr.mxu0 0.0
    %135 = vmatpush1.msra.mxu0 %v126
    %136 = vmatprep.subr.mxu0 0.0
    %137 = vmatpush1.msra.mxu0 %v125
    %138 = vmatprep.subr.mxu0 0.0
    %139 = vmatpush1.msra.mxu0 %v124
    %140 = vmatprep.subr.mxu0 0.0
    %141 = vmatpush1.msra.mxu0 %v123
    %142 = vmatprep.subr.mxu0 0.0
    %143 = vmatpush1.msra.mxu0 %v122
    %144 = vmatprep.subr.mxu0 0.0
    %145 = vmatpush1.msra.mxu0 %v121
    %146 = vmatprep.subr.mxu0 0.0
    %147 = vmatpush1.msra.mxu0 %v120
    %148 = vmatprep.subr.mxu0 0.0
    %149 = vmatpush1.msra.mxu0 %v119
    %150 = vmatprep.subr.mxu0 0.0
    %151 = vmatpush1.msra.mxu0 %v118
    %152 = vmatprep.subr.mxu0 0.0
    %153 = vmatpush1.msra.mxu0 %v117
    %154 = vmatprep.subr.mxu0 0.0
    %155 = vmatpush1.msra.mxu0 %v116
    %156 = vmatprep.subr.mxu0 0.0
    %157 = vmatpush1.msra.mxu0 %v115
    %158 = vmatprep.subr.mxu0 0.0
    %159 = vmatpush1.msra.mxu0 %v114
    %160 = vmatprep.subr.mxu0 0.0
    %161 = vmatpush1.msra.mxu0 %v113
    %162 = vmatprep.subr.mxu0 0.0
    %163 = vmatpush1.msra.mxu0 %v112
    %164 = vmatprep.subr.mxu0 0.0
    %165 = vmatpush1.msra.mxu0 %v111
    %166 = vmatprep.subr.mxu0 0.0
    %167 = vmatpush2.msra.mxu0 0.0
    %168 = vmatprep.subr.mxu0 0.0
    %169 = vmatpush2.msra.mxu0 0.0
    %170 = vmatprep.subr.mxu0 0.0
    %171 = vmatpush2.msra.mxu0 0.0
    %172 = vmatprep.subr.mxu0 0.0
    %173 = vmatpush2.msra.mxu0 0.0
    %174 = vmatprep.subr.mxu0 0.0
    %175 = vmatpush2.msra.mxu0 0.0
    %176 = vmatprep.subr.mxu0 0.0
    %177 = vmatpush2.msra.mxu0 0.0
    %178 = vmatprep.subr.mxu0 0.0
    %179 = vmatpush2.msra.mxu0 0.0
    %180 = vmatprep.subr.mxu0 0.0
    %181 = vmatpush2.msra.mxu0 0.0
    %182 = vmatprep.subr.mxu0 0.0
    %183 = vmatpush2.msra.mxu0 0.0
    %184 = vmatprep.subr.mxu0 0.0
    %185 = vmatpush2.msra.mxu0 0.0
    %186 = vmatprep.subr.mxu0 0.0
    %187 = vmatpush2.msra.mxu0 0.0
    %188 = vmatprep.subr.mxu0 0.0
    %189 = vmatpush2.msra.mxu0 0.0
    %190 = vmatprep.subr.mxu0 0.0
    %191 = vmatpush2.msra.mxu0 0.0
    %192 = vmatprep.subr.mxu0 0.0
    %193 = vmatpush2.msra.mxu0 0.0
    %194 = vmatprep.subr.mxu0 0.0
    %195 = vmatpush2.msra.mxu0 0.0
    %196 = vmatprep.subr.mxu0 0.0
    %197 = vmatpush2.msra.mxu0 0.0
    %198 = vmatprep.mubr.f32.mxu0 0.0
    %199 = vmatmul.mubr.f32.gmra.mxu0 %v110
    %v200 = vpop.f32.mrf.mxu0
    %v201 = vadd.f32 %v132, %v200
    %v202 = vpop.f32.mrf.mxu0
    %203 = vdwg.mxu0
    %v204 = vlaneseq
    %v205 = vand.u32 %v204, 127
    %vm206 = vcmp.lt.s32.totalorder %v205, 6
    %v207 = vsel %vm206, %v201, -1e+30
    %vm208 = vcmask 64512
    %v209 = vsel %vm208, %v207, -inf
    %210 = vmax.xlane.f32.xlu0 %v209
    %v211 = vpop.xlane.xlu0 %210
    %v212 = vsub.f32 %v207, %v211
    %v213 = vmul.f32 %v212, 1.442695
    %v214 = vpow.pop %v213
    %v215 = vsel %vm206, %v214, 0.0
    %v216 = vsel %vm208, %v215, 0.0
    %217 = vadd.xlane.f32.xlu0 %v216
    %v218 = vpop.xlane.xlu0 %217
    %v219 = vrcp.pop %v218
    %v220 = vmul.f32 %v215, %v219
    %v221 = vsel %vm206, %v220, %v201
    %222 = vst.msk [vmem:[#allocation2] sm:$0xff] %vm208, %v221
    // Predicated region
    $region22: #{tpu_custom_call.1} parent=1 // pred_check
      _
    $region23: #{tpu_custom_call.1} parent=1 // pred_check_branch
      %224 = sbr.rel (0) target = $region25
    $region24: #{tpu_custom_call.1} parent=1 // pred_region
      %s226 = ssub.s32 128, 128
      %227 = vsyncadd [#allocation3], %s226
      %s229 = sshll.u32 [#allocation2], 4
      %s230 = int_to_ptr.vmem [resolvable:$true] %s229
      %232 = dma.vmem_to_hbm [thread:$0]  %s230, 128, %s5, [#allocation3]
    $region25: #{tpu_custom_call.1} parent=1 // pred_fallthru
      _
    // Predicated region
    $region26: #{tpu_custom_call.1} parent=1 // pred_check
      _
    $region27: #{tpu_custom_call.1} parent=1 // pred_check_branch
      %234 = sbr.rel (0) target = $region29
    $region28: #{tpu_custom_call.1} parent=1 // pred_region
      %235 = dma.done [#allocation3], 128
    $region29: #{tpu_custom_call.1} parent=1 // pred_fallthru
      _
    %236 = vsyncpa [#allocation3], 1

</llo_original>
